<compile_context>
chip_gen: v7x
topology: tpu7x:2x2x1
jax: 0.10.0
libtpu: 0.0.40
codegen_flags: <defaults>
</compile_context>

<pallas_src>
import functools

import jax
import jax.numpy as jnp
from jax.experimental import pallas as pl
from jax.experimental.pallas import tpu as pltpu

LANE = 128


def _round_up(x, m):
    return (x + m - 1) // m * m


def _cdiv(a, b):
    return (a + b - 1) // b


def _pad2(a, rows, cols):
    return jnp.pad(a, ((0, rows - a.shape[0]), (0, cols - a.shape[1])))


def mlp_kernel(x_ref,
               w1_ref, b1_ref,
               w2_ref, b2_ref,
               w3_ref, b3_ref,
               w4_ref, b4_ref,
               o_ref):
    # bf16 operands -> MXU-native matmuls; f32 accumulation + f32 epilogue.
    h = jnp.dot(x_ref[...], w1_ref[...], preferred_element_type=jnp.float32)
    h = jnp.maximum(h + b1_ref[...], 0.0)
    h = jnp.dot(h.astype(jnp.bfloat16), w2_ref[...],
                preferred_element_type=jnp.float32)
    h = jnp.maximum(h + b2_ref[...], 0.0)
    h = jnp.dot(h.astype(jnp.bfloat16), w3_ref[...],
                preferred_element_type=jnp.float32)
    h = jnp.maximum(h + b3_ref[...], 0.0)
    h = jnp.dot(h.astype(jnp.bfloat16), w4_ref[...],
                preferred_element_type=jnp.float32)
    # Final layer: no activation (matches PyTorch forward).
    o_ref[...] = (h + b4_ref[...]).astype(o_ref.dtype)


def prepare_params(params):
    """One-time prep: lane-pad every feature dim to a multiple of 128 and cast
    weights to bf16.  Call ONCE after loading/initializing weights; never per
    forward (per-call jnp.pad of the weights doubled HBM traffic).

    NOTE: weights are stored (in, out); PyTorch nn.Linear stores (out, in), so
    transpose when importing a trained checkpoint.
    """
    in_dim, h1 = params["w1"].shape
    h2 = params["w2"].shape[1]
    h3 = params["w3"].shape[1]
    nc = params["w4"].shape[1]
    in_p, h1_p, h2_p, h3_p, nc_p = (
        _round_up(d, LANE) for d in (in_dim, h1, h2, h3, nc))
    padded = {
        "w1": _pad2(params["w1"], in_p, h1_p).astype(jnp.bfloat16),
        "b1": _pad2(params["b1"], 1, h1_p).astype(jnp.float32),
        "w2": _pad2(params["w2"], h1_p, h2_p).astype(jnp.bfloat16),
        "b2": _pad2(params["b2"], 1, h2_p).astype(jnp.float32),
        "w3": _pad2(params["w3"], h2_p, h3_p).astype(jnp.bfloat16),
        "b3": _pad2(params["b3"], 1, h3_p).astype(jnp.float32),
        "w4": _pad2(params["w4"], h3_p, nc_p).astype(jnp.bfloat16),
        "b4": _pad2(params["b4"], 1, nc_p).astype(jnp.float32),
    }
    return padded, nc


def _choose_tile_b(B, in_p, nc_p):
    """Static (trace-time) batch-tile heuristic."""
    B8 = _round_up(B, 8)
    if B8 <= 256:
        # Tiny batch: one grid step; block == full padded array, so the
        # (8,128) divisibility rule is trivially satisfied.
        tile_b = B8
    else:
        # Large batch: at least 2 (even) grid steps so v7x can shard the
        # parallel axis over both TensorCores and the pipeliner overlaps
        # DMA with compute; tiles capped around 2048 rows.
        n_steps = max(2, _cdiv(B8, 2048))
        if n_steps % 2:
            n_steps += 1
        tile_b = _round_up(_cdiv(B8, n_steps), 16)  # 16 = bf16 sublane granule
    # VMEM guard (matters when input_size is a vocab-sized bag of words):
    # keep the double-buffered x/out tiles under ~24 MiB so we stay inside
    # v7x's 32 MiB scoped default without raising vmem_limit_bytes.
    def act_vmem_bytes(tb):
        return 2 * (tb * in_p * 2 + tb * nc_p * 4)  # bf16 x + f32 out, x2 buf
    while tile_b > 16 and act_vmem_bytes(tile_b) > 24 * 1024 * 1024:
        tile_b = max(16, _round_up(tile_b // 2, 16))
    return tile_b


@functools.partial(jax.jit, static_argnames=("num_classes", "tile_b"))
def neural_net_forward(x, padded_params, num_classes, *, tile_b=None):
    """x: (B, input_size) float; padded_params: output of prepare_params."""
    B, _ = x.shape
    w1, b1 = padded_params["w1"], padded_params["b1"]
    w2, b2 = padded_params["w2"], padded_params["b2"]
    w3, b3 = padded_params["w3"], padded_params["b3"]
    w4, b4 = padded_params["w4"], padded_params["b4"]
    in_p, h1_p = w1.shape
    h2_p, h3_p, nc_p = w2.shape[1], w3.shape[1], w4.shape[1]

    if tile_b is None:
        tile_b = _choose_tile_b(B, in_p, nc_p)
    B_p = _round_up(max(B, 8), tile_b)

    # Only the activations are padded per call (cast to bf16 first to halve
    # the pad/DMA bytes); weights were padded once in prepare_params.
    xp = _pad2(x.astype(jnp.bfloat16), B_p, in_p)

    grid = (B_p // tile_b,)

    # Advisory cost from the *padded* shapes the kernel actually executes.
    w_elems = in_p * h1_p + h1_p * h2_p + h2_p * h3_p + h3_p * nc_p
    flops = 2 * B_p * w_elems
    bytes_accessed = (2 * B_p * in_p + 4 * B_p * nc_p
                      + 2 * w_elems + 4 * (h1_p + h2_p + h3_p + nc_p))

    const = lambda i: (0, 0)       # weights/biases: VMEM-resident across steps
    batch_map = lambda i: (i, 0)   # activations: pipelined over batch tiles
    # NOTE: the constant-index weight specs could use pipeline_mode=
    # pl.Buffered(1) to halve their VMEM footprint on v7x; at 128-wide layers
    # the default double-buffering costs <1 MiB, so we keep the default.

    out_padded = pl.pallas_call(
        mlp_kernel,
        out_shape=jax.ShapeDtypeStruct((B_p, nc_p), jnp.float32),
        grid_spec=pltpu.PrefetchScalarGridSpec(
            num_scalar_prefetch=0,
            grid=grid,
            in_specs=[
                pl.BlockSpec((tile_b, in_p), batch_map),
                pl.BlockSpec((in_p, h1_p), const),
                pl.BlockSpec((1, h1_p), const),
                pl.BlockSpec((h1_p, h2_p), const),
                pl.BlockSpec((1, h2_p), const),
                pl.BlockSpec((h2_p, h3_p), const),
                pl.BlockSpec((1, h3_p), const),
                pl.BlockSpec((h3_p, nc_p), const),
                pl.BlockSpec((1, nc_p), const),
            ],
            out_specs=pl.BlockSpec((tile_b, nc_p), batch_map),
        ),
        compiler_params=pltpu.CompilerParams(
            dimension_semantics=("parallel",),  # v7x: shard batch over 2 TCs
        ),
        cost_estimate=pl.CostEstimate(
            flops=flops, transcendentals=0, bytes_accessed=bytes_accessed),
    )(xp, w1, b1, w2, b2, w3, b3, w4, b4)

    # Slice the lane-padded / batch-padded slab back to the logical shape.
    return out_padded[:B, :num_classes]


def init_params(key, input_size, h1, h2, h3, num_classes):
    """Deterministic init mimicking PyTorch's U(-1/sqrt(fan_in), 1/sqrt(fan_in))."""
    dims = [(input_size, h1), (h1, h2), (h2, h3), (h3, num_classes)]
    params = {}
    for i, (fan_in, fan_out) in enumerate(dims, start=1):
        key, kw, kb = jax.random.split(key, 3)
        bound = 1.0 / jnp.sqrt(jnp.float32(fan_in))
        params[f"w{i}"] = jax.random.uniform(
            kw, (fan_in, fan_out), jnp.float32, -bound, bound)
        params[f"b{i}"] = jax.random.uniform(
            kb, (1, fan_out), jnp.float32, -bound, bound)
    return params


def reference_forward(x, params):
    h = jnp.maximum(x @ params["w1"] + params["b1"], 0.0)
    h = jnp.maximum(h @ params["w2"] + params["b2"], 0.0)
    h = jnp.maximum(h @ params["w3"] + params["b3"], 0.0)
    return h @ params["w4"] + params["b4"]


if __name__ == "__main__":
    # Small shapes consistent with the module's forward:
    batch, input_size = 8, 32
    h1, h2, h3, num_classes = 64, 32, 16, 8

    key = jax.random.PRNGKey(0)
    key, kx = jax.random.split(key)
    x = jax.random.normal(kx, (batch, input_size), jnp.float32)
    params = init_params(key, input_size, h1, h2, h3, num_classes)

    # One-time weight prep (padding + bf16 cast) outside the hot path.
    padded_params, nc = prepare_params(params)

    out = neural_net_forward(x, padded_params, nc)
    out = jax.block_until_ready(out)

    ref = reference_forward(x, params)
    assert out.shape == (batch, num_classes)
    # bf16 matmul operands with f32 accumulation: loosened tolerance.
    assert jnp.allclose(out, ref, atol=2e-2, rtol=2e-2)

    print("KERNEL_OK")
</pallas_src>

<mosaic_0001>
module attributes {stable_mosaic.version = 11 : i64} {
  func.func @mlp_kernel(%arg0: i32, %arg1: memref<8x128xbf16, #tpu.memory_space<vmem>>, %arg2: memref<128x128xbf16, #tpu.memory_space<vmem>>, %arg3: memref<1x128xf32, #tpu.memory_space<vmem>>, %arg4: memref<128x128xbf16, #tpu.memory_space<vmem>>, %arg5: memref<1x128xf32, #tpu.memory_space<vmem>>, %arg6: memref<128x128xbf16, #tpu.memory_space<vmem>>, %arg7: memref<1x128xf32, #tpu.memory_space<vmem>>, %arg8: memref<128x128xbf16, #tpu.memory_space<vmem>>, %arg9: memref<1x128xf32, #tpu.memory_space<vmem>>, %arg10: memref<8x128xf32, #tpu.memory_space<vmem>>) attributes {dimension_semantics = [#tpu.dimension_semantics<parallel>], iteration_bounds = array<i64: 1>, scalar_prefetch = 0 : i64, scratch_operands = 0 : i64, tpu.core_type = #tpu.core_type<tc>, window_params = [{transform_indices = @transform_0, window_bounds = array<i64: 8, 128>}, {pipeline_mode = #tpu.pipeline_mode<synchronous>, transform_indices = @transform_1, window_bounds = array<i64: 128, 128>}, {pipeline_mode = #tpu.pipeline_mode<synchronous>, transform_indices = @transform_2, window_bounds = array<i64: 1, 128>}, {pipeline_mode = #tpu.pipeline_mode<synchronous>, transform_indices = @transform_3, window_bounds = array<i64: 128, 128>}, {pipeline_mode = #tpu.pipeline_mode<synchronous>, transform_indices = @transform_4, window_bounds = array<i64: 1, 128>}, {pipeline_mode = #tpu.pipeline_mode<synchronous>, transform_indices = @transform_5, window_bounds = array<i64: 128, 128>}, {pipeline_mode = #tpu.pipeline_mode<synchronous>, transform_indices = @transform_6, window_bounds = array<i64: 1, 128>}, {pipeline_mode = #tpu.pipeline_mode<synchronous>, transform_indices = @transform_7, window_bounds = array<i64: 128, 128>}, {pipeline_mode = #tpu.pipeline_mode<synchronous>, transform_indices = @transform_8, window_bounds = array<i64: 1, 128>}, {transform_indices = @transform_9, window_bounds = array<i64: 8, 128>}]} {
    %c0 = arith.constant 0 : index
    %c0_0 = arith.constant 0 : index
    %0 = vector.load %arg1[%c0, %c0_0] : memref<8x128xbf16, #tpu.memory_space<vmem>>, vector<8x128xbf16>
    %c0_1 = arith.constant 0 : index
    %c0_2 = arith.constant 0 : index
    %1 = vector.load %arg2[%c0_1, %c0_2] : memref<128x128xbf16, #tpu.memory_space<vmem>>, vector<128x128xbf16>
    %cst = arith.constant dense<0.000000e+00> : vector<8x128xf32>
    %2 = tpu.matmul %0, %1, %cst {dimension_numbers = #tpu.dot_dimension_numbers<[1], [0], [0], [1], [0, 0, 1, 1], [], []>} : vector<8x128xbf16>, vector<128x128xbf16>, vector<8x128xf32> -> vector<8x128xf32>
    %c0_3 = arith.constant 0 : index
    %c0_4 = arith.constant 0 : index
    %3 = vector.load %arg3[%c0_3, %c0_4] : memref<1x128xf32, #tpu.memory_space<vmem>>, vector<1x128xf32>
    %4 = vector.broadcast %3 : vector<1x128xf32> to vector<8x128xf32>
    %5 = arith.addf %2, %4 : vector<8x128xf32>
    %cst_5 = arith.constant 0.000000e+00 : f32
    %6 = vector.broadcast %cst_5 : f32 to vector<8x128xf32>
    %7 = arith.maximumf %5, %6 : vector<8x128xf32>
    %8 = arith.truncf %7 : vector<8x128xf32> to vector<8x128xbf16>
    %c0_6 = arith.constant 0 : index
    %c0_7 = arith.constant 0 : index
    %9 = vector.load %arg4[%c0_6, %c0_7] : memref<128x128xbf16, #tpu.memory_space<vmem>>, vector<128x128xbf16>
    %cst_8 = arith.constant dense<0.000000e+00> : vector<8x128xf32>
    %10 = tpu.matmul %8, %9, %cst_8 {dimension_numbers = #tpu.dot_dimension_numbers<[1], [0], [0], [1], [0, 0, 1, 1], [], []>} : vector<8x128xbf16>, vector<128x128xbf16>, vector<8x128xf32> -> vector<8x128xf32>
    %c0_9 = arith.constant 0 : index
    %c0_10 = arith.constant 0 : index
    %11 = vector.load %arg5[%c0_9, %c0_10] : memref<1x128xf32, #tpu.memory_space<vmem>>, vector<1x128xf32>
    %12 = vector.broadcast %11 : vector<1x128xf32> to vector<8x128xf32>
    %13 = arith.addf %10, %12 : vector<8x128xf32>
    %cst_11 = arith.constant 0.000000e+00 : f32
    %14 = vector.broadcast %cst_11 : f32 to vector<8x128xf32>
    %15 = arith.maximumf %13, %14 : vector<8x128xf32>
    %16 = arith.truncf %15 : vector<8x128xf32> to vector<8x128xbf16>
    %c0_12 = arith.constant 0 : index
    %c0_13 = arith.constant 0 : index
    %17 = vector.load %arg6[%c0_12, %c0_13] : memref<128x128xbf16, #tpu.memory_space<vmem>>, vector<128x128xbf16>
    %cst_14 = arith.constant dense<0.000000e+00> : vector<8x128xf32>
    %18 = tpu.matmul %16, %17, %cst_14 {dimension_numbers = #tpu.dot_dimension_numbers<[1], [0], [0], [1], [0, 0, 1, 1], [], []>} : vector<8x128xbf16>, vector<128x128xbf16>, vector<8x128xf32> -> vector<8x128xf32>
    %c0_15 = arith.constant 0 : index
    %c0_16 = arith.constant 0 : index
    %19 = vector.load %arg7[%c0_15, %c0_16] : memref<1x128xf32, #tpu.memory_space<vmem>>, vector<1x128xf32>
    %20 = vector.broadcast %19 : vector<1x128xf32> to vector<8x128xf32>
    %21 = arith.addf %18, %20 : vector<8x128xf32>
    %cst_17 = arith.constant 0.000000e+00 : f32
    %22 = vector.broadcast %cst_17 : f32 to vector<8x128xf32>
    %23 = arith.maximumf %21, %22 : vector<8x128xf32>
    %24 = arith.truncf %23 : vector<8x128xf32> to vector<8x128xbf16>
    %c0_18 = arith.constant 0 : index
    %c0_19 = arith.constant 0 : index
    %25 = vector.load %arg8[%c0_18, %c0_19] : memref<128x128xbf16, #tpu.memory_space<vmem>>, vector<128x128xbf16>
    %cst_20 = arith.constant dense<0.000000e+00> : vector<8x128xf32>
    %26 = tpu.matmul %24, %25, %cst_20 {dimension_numbers = #tpu.dot_dimension_numbers<[1], [0], [0], [1], [0, 0, 1, 1], [], []>} : vector<8x128xbf16>, vector<128x128xbf16>, vector<8x128xf32> -> vector<8x128xf32>
    %c0_21 = arith.constant 0 : index
    %c0_22 = arith.constant 0 : index
    %27 = vector.load %arg9[%c0_21, %c0_22] : memref<1x128xf32, #tpu.memory_space<vmem>>, vector<1x128xf32>
    %28 = vector.broadcast %27 : vector<1x128xf32> to vector<8x128xf32>
    %29 = arith.addf %26, %28 : vector<8x128xf32>
    %c0_23 = arith.constant 0 : index
    %c0_24 = arith.constant 0 : index
    %30 = vector.load %arg10[%c0_23, %c0_24] : memref<8x128xf32, #tpu.memory_space<vmem>>, vector<8x128xf32>
    tpu.vector_store %arg10[%c0_23, %c0_24], %29 {strides = array<i32>} : memref<8x128xf32, #tpu.memory_space<vmem>>, vector<8x128xf32>,
    return
  }
  func.func @transform_0(%arg0: i32) -> (i32, i32) {
    %c0_i32 = arith.constant 0 : i32
    %c0_i32_0 = arith.constant 0 : i32
    return %arg0, %c0_i32 : i32, i32
  }
  func.func @transform_1(%arg0: i32) -> (i32, i32) {
    %c0_i32 = arith.constant 0 : i32
    %c0_i32_0 = arith.constant 0 : i32
    %c0_i32_1 = arith.constant 0 : i32
    return %c0_i32, %c0_i32_0 : i32, i32
  }
  func.func @transform_2(%arg0: i32) -> (i32, i32) {
    %c0_i32 = arith.constant 0 : i32
    %c0_i32_0 = arith.constant 0 : i32
    %c0_i32_1 = arith.constant 0 : i32
    return %c0_i32, %c0_i32_0 : i32, i32
  }
  func.func @transform_3(%arg0: i32) -> (i32, i32) {
    %c0_i32 = arith.constant 0 : i32
    %c0_i32_0 = arith.constant 0 : i32
    %c0_i32_1 = arith.constant 0 : i32
    return %c0_i32, %c0_i32_0 : i32, i32
  }
  func.func @transform_4(%arg0: i32) -> (i32, i32) {
    %c0_i32 = arith.constant 0 : i32
    %c0_i32_0 = arith.constant 0 : i32
    %c0_i32_1 = arith.constant 0 : i32
    return %c0_i32, %c0_i32_0 : i32, i32
  }
  func.func @transform_5(%arg0: i32) -> (i32, i32) {
    %c0_i32 = arith.constant 0 : i32
    %c0_i32_0 = arith.constant 0 : i32
    %c0_i32_1 = arith.constant 0 : i32
    return %c0_i32, %c0_i32_0 : i32, i32
  }
  func.func @transform_6(%arg0: i32) -> (i32, i32) {
    %c0_i32 = arith.constant 0 : i32
    %c0_i32_0 = arith.constant 0 : i32
    %c0_i32_1 = arith.constant 0 : i32
    return %c0_i32, %c0_i32_0 : i32, i32
  }
  func.func @transform_7(%arg0: i32) -> (i32, i32) {
    %c0_i32 = arith.constant 0 : i32
    %c0_i32_0 = arith.constant 0 : i32
    %c0_i32_1 = arith.constant 0 : i32
    return %c0_i32, %c0_i32_0 : i32, i32
  }
  func.func @transform_8(%arg0: i32) -> (i32, i32) {
    %c0_i32 = arith.constant 0 : i32
    %c0_i32_0 = arith.constant 0 : i32
    %c0_i32_1 = arith.constant 0 : i32
    return %c0_i32, %c0_i32_0 : i32, i32
  }
  func.func @transform_9(%arg0: i32) -> (i32, i32) {
    %c0_i32 = arith.constant 0 : i32
    %c0_i32_0 = arith.constant 0 : i32
    return %arg0, %c0_i32 : i32, i32
  }
}

</mosaic_0001>

<llo_original>
// kernel: neural_net_forward.1
$region0: #{neural_net_forward.1}
  #allocation0 [shape = 'u32[]', space=smem, size = 0x4, offset = 0x4, fixed_abs, tag = 'smem constant byte address 0x4 - core index']
  #allocation1 [shape = 'u32[144,128]{1,0:T(1,128)}', space=vmem, size = 0x12000, scoped, tag = 'internal scratch']
  %s0 = inlined_call_operand.vmem [shape: bf16[8,128], index: 0, kind: input, shape index: {}]
  %s1 = inlined_call_operand.hbm [shape: bf16[128,128], index: 1, kind: input, shape index: {}]
  %s2 = inlined_call_operand.vmem [shape: f32[1,128], index: 2, kind: input, shape index: {}]
  %s3 = inlined_call_operand.hbm [shape: bf16[128,128], index: 3, kind: input, shape index: {}]
  %s4 = inlined_call_operand.vmem [shape: f32[1,128], index: 4, kind: input, shape index: {}]
  %s5 = inlined_call_operand.hbm [shape: bf16[128,128], index: 5, kind: input, shape index: {}]
  %s6 = inlined_call_operand.vmem [shape: f32[1,128], index: 6, kind: input, shape index: {}]
  %s7 = inlined_call_operand.hbm [shape: bf16[128,128], index: 7, kind: input, shape index: {}]
  %s8 = inlined_call_operand.vmem [shape: f32[1,128], index: 8, kind: input, shape index: {}]
  %s9 = inlined_call_operand.hbm [shape: f32[8,128], index: 9, kind: output, shape index: {}]
  %s10 = sld [smem:[#allocation0]]
  $region62: #{neural_net_forward.1} parent=0
    _
  %s12 = ssub.s32 1, %s10
  %s13 = scalar_select 0, %s12, %s10
  $region1: #{neural_net_forward.1} parent=0
    #allocation2 [shape = 'u8[32768]{0}', space=vmem, size = 0x8000, scoped, tag = 'input window, operand 1, single buffered']
    #allocation3 [shape = 's32[1]{0}', space=sflag, size = 0x4, scoped, tag = 'scoped memory for neural_net_forward.1']
    #allocation4 [shape = 's32[1]{0}', space=sflag, size = 0x4, scoped, tag = 'scoped memory for neural_net_forward.1']
    #allocation5 [shape = 'u8[32768]{0}', space=vmem, size = 0x8000, scoped, tag = 'input window, operand 3, single buffered']
    #allocation6 [shape = 's32[1]{0}', space=sflag, size = 0x4, scoped, tag = 'scoped memory for neural_net_forward.1']
    #allocation7 [shape = 'u8[32768]{0}', space=vmem, size = 0x8000, scoped, tag = 'input window, operand 5, single buffered']
    #allocation8 [shape = 'u8[32768]{0}', space=vmem, size = 0x8000, scoped, tag = 'input window, operand 7, single buffered']
    #allocation9 [shape = 's32[1]{0}', space=sflag, size = 0x4, scoped, tag = 'scoped memory for neural_net_forward.1']
    #allocation10 [shape = 'u8[4096]{0}', space=vmem, size = 0x1000, scoped, tag = 'output window, operand 0, single buffered']
    %14 = vsyncpa [#allocation3], 0
    %15 = vsyncpa [#allocation6], 0
    %16 = vsyncpa [#allocation9], 0
    %17 = vsyncpa [#allocation4], 0
    // Predicated region
    $region2: #{neural_net_forward.1} parent=1 // pred_check
      _
    $region3: #{neural_net_forward.1} parent=1 // pred_check_branch
      %19 = sbr.rel (0) target = $region5
    $region4: #{neural_net_forward.1} parent=1 // pred_region
      _
    $region5: #{neural_net_forward.1} parent=1 // pred_fallthru
      _
    // Predicated region
    $region6: #{neural_net_forward.1} parent=1 // pred_check
      _
    $region7: #{neural_net_forward.1} parent=1 // pred_check_branch
      %21 = sbr.rel (0) target = $region9
    $region8: #{neural_net_forward.1} parent=1 // pred_region
      %s23 = ssub.s32 1024, 1024
      %24 = vsyncadd [#allocation3], %s23
      %s25 = sshll.u32 [#allocation2], 4
      %s26 = int_to_ptr.vmem [resolvable:$true] %s25
      %31 = dma.hbm_to_vmem [thread:$0]  %s1, 1024, %s26, [#allocation3], 64, 64, 4
    $region9: #{neural_net_forward.1} parent=1 // pred_fallthru
      _
    // Predicated region
    $region10: #{neural_net_forward.1} parent=1 // pred_check
      _
    $region11: #{neural_net_forward.1} parent=1 // pred_check_branch
      %33 = sbr.rel (0) target = $region13
    $region12: #{neural_net_forward.1} parent=1 // pred_region
      _
    $region13: #{neural_net_forward.1} parent=1 // pred_fallthru
      _
    // Predicated region
    $region14: #{neural_net_forward.1} parent=1 // pred_check
      _
    $region15: #{neural_net_forward.1} parent=1 // pred_check_branch
      %35 = sbr.rel (0) target = $region17
    $region16: #{neural_net_forward.1} parent=1 // pred_region
      %s37 = ssub.s32 1024, 1024
      %38 = vsyncadd [#allocation6], %s37
      %s39 = sshll.u32 [#allocation5], 4
      %s40 = int_to_ptr.vmem [resolvable:$true] %s39
      %45 = dma.hbm_to_vmem [thread:$0]  %s3, 1024, %s40, [#allocation6], 64, 64, 4
    $region17: #{neural_net_forward.1} parent=1 // pred_fallthru
      _
    // Predicated region
    $region18: #{neural_net_forward.1} parent=1 // pred_check
      _
    $region19: #{neural_net_forward.1} parent=1 // pred_check_branch
      %47 = sbr.rel (0) target = $region21
    $region20: #{neural_net_forward.1} parent=1 // pred_region
      _
    $region21: #{neural_net_forward.1} parent=1 // pred_fallthru
      _
    // Predicated region
    $region22: #{neural_net_forward.1} parent=1 // pred_check
      _
    $region23: #{neural_net_forward.1} parent=1 // pred_check_branch
      %49 = sbr.rel (0) target = $region25
    $region24: #{neural_net_forward.1} parent=1 // pred_region
      %s51 = ssub.s32 1024, 1024
      %52 = vsyncadd [#allocation6], %s51
      %s53 = sshll.u32 [#allocation7], 4
      %s54 = int_to_ptr.vmem [resolvable:$true] %s53
      %59 = dma.hbm_to_vmem [thread:$0]  %s5, 1024, %s54, [#allocation6], 64, 64, 4
    $region25: #{neural_net_forward.1} parent=1 // pred_fallthru
      _
    // Predicated region
    $region26: #{neural_net_forward.1} parent=1 // pred_check
      _
    $region27: #{neural_net_forward.1} parent=1 // pred_check_branch
      %61 = sbr.rel (0) target = $region29
    $region28: #{neural_net_forward.1} parent=1 // pred_region
      _
    $region29: #{neural_net_forward.1} parent=1 // pred_fallthru
      _
    // Predicated region
    $region30: #{neural_net_forward.1} parent=1 // pred_check
      _
    $region31: #{neural_net_forward.1} parent=1 // pred_check_branch
      %63 = sbr.rel (0) target = $region33
    $region32: #{neural_net_forward.1} parent=1 // pred_region
      %s65 = ssub.s32 1024, 1024
      %66 = vsyncadd [#allocation9], %s65
      %s67 = sshll.u32 [#allocation8], 4
      %s68 = int_to_ptr.vmem [resolvable:$true] %s67
      %73 = dma.hbm_to_vmem [thread:$0]  %s7, 1024, %s68, [#allocation9], 64, 64, 4
    $region33: #{neural_net_forward.1} parent=1 // pred_fallthru
      _
    // Predicated region
    $region34: #{neural_net_forward.1} parent=1 // pred_check
      _
    $region35: #{neural_net_forward.1} parent=1 // pred_check_branch
      %75 = sbr.rel (0) target = $region37
    $region36: #{neural_net_forward.1} parent=1 // pred_region
      _
    $region37: #{neural_net_forward.1} parent=1 // pred_fallthru
      _
    // Predicated region
    $region38: #{neural_net_forward.1} parent=1 // pred_check
      _
    $region39: #{neural_net_forward.1} parent=1 // pred_check_branch
      %77 = sbr.rel (0) target = $region41
    $region40: #{neural_net_forward.1} parent=1 // pred_region
      %78 = dma.done [#allocation3], 1024
    $region41: #{neural_net_forward.1} parent=1 // pred_fallthru
      _
    // Predicated region
    $region42: #{neural_net_forward.1} parent=1 // pred_check
      _
    $region43: #{neural_net_forward.1} parent=1 // pred_check_branch
      %80 = sbr.rel (0) target = $region45
    $region44: #{neural_net_forward.1} parent=1 // pred_region
      %81 = dma.done [#allocation6], 1024
    $region45: #{neural_net_forward.1} parent=1 // pred_fallthru
      _
    // Predicated region
    $region46: #{neural_net_forward.1} parent=1 // pred_check
      _
    $region47: #{neural_net_forward.1} parent=1 // pred_check_branch
      %83 = sbr.rel (0) target = $region49
    $region48: #{neural_net_forward.1} parent=1 // pred_region
      %84 = dma.done [#allocation6], 1024
    $region49: #{neural_net_forward.1} parent=1 // pred_fallthru
      _
    // Predicated region
    $region50: #{neural_net_forward.1} parent=1 // pred_check
      _
    $region51: #{neural_net_forward.1} parent=1 // pred_check_branch
      %86 = sbr.rel (0) target = $region53
    $region52: #{neural_net_forward.1} parent=1 // pred_region
      %87 = dma.done [#allocation9], 1024
    $region53: #{neural_net_forward.1} parent=1 // pred_fallthru
      _
    %v89 = vld [vmem:[%s0] sm:$0xf]
    %v90 = vld [vmem:[#allocation2] sm:$0xf]
    %v91 = vld [vmem:[#allocation2 + $0x4] sm:$0xf]
    %v92 = vld [vmem:[#allocation2 + $0x8] sm:$0xf]
    %v93 = vld [vmem:[#allocation2 + $0xc] sm:$0xf]
    %v94 = vld [vmem:[#allocation2 + $0x10] sm:$0xf]
    %v95 = vld [vmem:[#allocation2 + $0x14] sm:$0xf]
    %v96 = vld [vmem:[#allocation2 + $0x18] sm:$0xf]
    %v97 = vld [vmem:[#allocation2 + $0x1c] sm:$0xf]
    %v98 = vld [vmem:[#allocation2 + $0x20] sm:$0xf]
    %v99 = vld [vmem:[#allocation2 + $0x24] sm:$0xf]
    %v100 = vld [vmem:[#allocation2 + $0x28] sm:$0xf]
    %v101 = vld [vmem:[#allocation2 + $0x2c] sm:$0xf]
    %v102 = vld [vmem:[#allocation2 + $0x30] sm:$0xf]
    %v103 = vld [vmem:[#allocation2 + $0x34] sm:$0xf]
    %v104 = vld [vmem:[#allocation2 + $0x38] sm:$0xf]
    %v105 = vld [vmem:[#allocation2 + $0x3c] sm:$0xf]
    %v106 = vld [vmem:[%s2] sm:$0x1]
    %v108 = vlaneseq
    %v109 = vshrl.u32 %v108, 7
    %v110 = vsub.s32 0, %v109
    %v111 = vrot.slane %v106, %v110
    %v129 = vunpack.c.l.b16 %v90
    %v130 = vunpack.c.l.b16 %v91
    %v131 = vunpack.c.l.b16 %v92
    %v132 = vunpack.c.l.b16 %v93
    %v133 = vunpack.c.l.b16 %v94
    %v134 = vunpack.c.l.b16 %v95
    %v135 = vunpack.c.l.b16 %v96
    %v136 = vunpack.c.l.b16 %v97
    %v137 = vunpack.c.l.b16 %v98
    %v138 = vunpack.c.l.b16 %v99
    %v139 = vunpack.c.l.b16 %v100
    %v140 = vunpack.c.l.b16 %v101
    %v141 = vunpack.c.l.b16 %v102
    %v142 = vunpack.c.l.b16 %v103
    %v143 = vunpack.c.l.b16 %v104
    %v144 = vunpack.c.l.b16 %v105
    %v145 = vpack.c.b16 %v130, %v129
    %v146 = vpack.c.b16 %v132, %v131
    %v147 = vpack.c.b16 %v134, %v133
    %v148 = vpack.c.b16 %v136, %v135
    %v149 = vpack.c.b16 %v138, %v137
    %v150 = vpack.c.b16 %v140, %v139
    %v151 = vpack.c.b16 %v142, %v141
    %v152 = vpack.c.b16 %v144, %v143
    %161 = vmatprep.subr.bf16.mxu0 0
    %162 = vmatpush1.bf16.msra.mxu0 %v145
    %163 = vmatprep.subr.bf16.mxu0 0
    %164 = vmatpush1.bf16.msra.mxu0 %v146
    %165 = vmatprep.subr.bf16.mxu0 0
    %166 = vmatpush1.bf16.msra.mxu0 %v147
    %167 = vmatprep.subr.bf16.mxu0 0
    %168 = vmatpush1.bf16.msra.mxu0 %v148
    %169 = vmatprep.subr.bf16.mxu0 0
    %170 = vmatpush1.bf16.msra.mxu0 %v149
    %171 = vmatprep.subr.bf16.mxu0 0
    %172 = vmatpush1.bf16.msra.mxu0 %v150
    %173 = vmatprep.subr.bf16.mxu0 0
    %174 = vmatpush1.bf16.msra.mxu0 %v151
    %175 = vmatprep.subr.bf16.mxu0 0
    %176 = vmatpush1.bf16.msra.mxu0 %v152
    %177 = vmatprep.subr.bf16.mxu0 0
    %178 = vmatpush1.bf16.msra.mxu0 0
    %179 = vmatprep.subr.bf16.mxu0 0
    %180 = vmatpush1.bf16.msra.mxu0 0
    %181 = vmatprep.subr.bf16.mxu0 0
    %182 = vmatpush1.bf16.msra.mxu0 0
    %183 = vmatprep.subr.bf16.mxu0 0
    %184 = vmatpush1.bf16.msra.mxu0 0
    %185 = vmatprep.subr.bf16.mxu0 0
    %186 = vmatpush1.bf16.msra.mxu0 0
    %187 = vmatprep.subr.bf16.mxu0 0
    %188 = vmatpush1.bf16.msra.mxu0 0
    %189 = vmatprep.subr.bf16.mxu0 0
    %190 = vmatpush1.bf16.msra.mxu0 0
    %191 = vmatprep.subr.bf16.mxu0 0
    %192 = vmatpush1.bf16.msra.mxu0 0
    %193 = vmatprep.mubr.bf16.mxu0 0
    %194 = vmatmul.mubr.bf16.gmra.mrb[0].mxu0 %v89
    %v195 = vpop.f32.mrb[0].mxu0
    %v196 = vadd.f32 %v111, %v195
    %v197 = vpop.f32.mrb[0].mxu0
    %v198 = vpop.f32.mrb[0].mxu0
    %v199 = vpop.f32.mrb[0].mxu0
    %200 = vdwg.mxu0
    %v201 = vmax.f32 %v196, 0.0
    %v202 = vpack.c.bf16 %v201, %v201
    %v203 = vld [vmem:[#allocation5] sm:$0xf]
    %v204 = vld [vmem:[#allocation5 + $0x4] sm:$0xf]
    %v205 = vld [vmem:[#allocation5 + $0x8] sm:$0xf]
    %v206 = vld [vmem:[#allocation5 + $0xc] sm:$0xf]
    %v207 = vld [vmem:[#allocation5 + $0x10] sm:$0xf]
    %v208 = vld [vmem:[#allocation5 + $0x14] sm:$0xf]
    %v209 = vld [vmem:[#allocation5 + $0x18] sm:$0xf]
    %v210 = vld [vmem:[#allocation5 + $0x1c] sm:$0xf]
    %v211 = vld [vmem:[#allocation5 + $0x20] sm:$0xf]
    %v212 = vld [vmem:[#allocation5 + $0x24] sm:$0xf]
    %v213 = vld [vmem:[#allocation5 + $0x28] sm:$0xf]
    %v214 = vld [vmem:[#allocation5 + $0x2c] sm:$0xf]
    %v215 = vld [vmem:[#allocation5 + $0x30] sm:$0xf]
    %v216 = vld [vmem:[#allocation5 + $0x34] sm:$0xf]
    %v217 = vld [vmem:[#allocation5 + $0x38] sm:$0xf]
    %v218 = vld [vmem:[#allocation5 + $0x3c] sm:$0xf]
    %v219 = vld [vmem:[%s4] sm:$0x1]
    %v221 = vlaneseq
    %v222 = vshrl.u32 %v221, 7
    %v223 = vsub.s32 0, %v222
    %v224 = vrot.slane %v219, %v223
    %v242 = vunpack.c.l.b16 %v203
    %v243 = vunpack.c.l.b16 %v204
    %v244 = vunpack.c.l.b16 %v205
    %v245 = vunpack.c.l.b16 %v206
    %v246 = vunpack.c.l.b16 %v207
    %v247 = vunpack.c.l.b16 %v208
    %v248 = vunpack.c.l.b16 %v209
    %v249 = vunpack.c.l.b16 %v210
    %v250 = vunpack.c.l.b16 %v211
    %v251 = vunpack.c.l.b16 %v212
    %v252 = vunpack.c.l.b16 %v213
    %v253 = vunpack.c.l.b16 %v214
    %v254 = vunpack.c.l.b16 %v215
    %v255 = vunpack.c.l.b16 %v216
    %v256 = vunpack.c.l.b16 %v217
    %v257 = vunpack.c.l.b16 %v218
    %v258 = vpack.c.b16 %v243, %v242
    %v259 = vpack.c.b16 %v245, %v244
    %v260 = vpack.c.b16 %v247, %v246
    %v261 = vpack.c.b16 %v249, %v248
    %v262 = vpack.c.b16 %v251, %v250
    %v263 = vpack.c.b16 %v253, %v252
    %v264 = vpack.c.b16 %v255, %v254
    %v265 = vpack.c.b16 %v257, %v256
    %274 = vmatprep.subr.bf16.mxu0 0
    %275 = vmatpush1.bf16.msra.mxu0 %v258
    %276 = vmatprep.subr.bf16.mxu0 0
    %277 = vmatpush1.bf16.msra.mxu0 %v259
    %278 = vmatprep.subr.bf16.mxu0 0
    %279 = vmatpush1.bf16.msra.mxu0 %v260
    %280 = vmatprep.subr.bf16.mxu0 0
    %281 = vmatpush1.bf16.msra.mxu0 %v261
    %282 = vmatprep.subr.bf16.mxu0 0
    %283 = vmatpush1.bf16.msra.mxu0 %v262
    %284 = vmatprep.subr.bf16.mxu0 0
    %285 = vmatpush1.bf16.msra.mxu0 %v263
    %286 = vmatprep.subr.bf16.mxu0 0
    %287 = vmatpush1.bf16.msra.mxu0 %v264
    %288 = vmatprep.subr.bf16.mxu0 0
    %289 = vmatpush1.bf16.msra.mxu0 %v265
    %290 = vmatprep.subr.bf16.mxu0 0
    %291 = vmatpush1.bf16.msra.mxu0 0
    %292 = vmatprep.subr.bf16.mxu0 0
    %293 = vmatpush1.bf16.msra.mxu0 0
    %294 = vmatprep.subr.bf16.mxu0 0
    %295 = vmatpush1.bf16.msra.mxu0 0
    %296 = vmatprep.subr.bf16.mxu0 0
    %297 = vmatpush1.bf16.msra.mxu0 0
    %298 = vmatprep.subr.bf16.mxu0 0
    %299 = vmatpush1.bf16.msra.mxu0 0
    %300 = vmatprep.subr.bf16.mxu0 0
    %301 = vmatpush1.bf16.msra.mxu0 0
    %302 = vmatprep.subr.bf16.mxu0 0
    %303 = vmatpush1.bf16.msra.mxu0 0
    %304 = vmatprep.subr.bf16.mxu0 0
    %305 = vmatpush1.bf16.msra.mxu0 0
    %306 = vmatprep.mubr.bf16.mxu0 0
    %307 = vmatmul.mubr.bf16.gmra.mrb[0].mxu0 %v202
    %v308 = vpop.f32.mrb[0].mxu0
    %v309 = vadd.f32 %v224, %v308
    %v310 = vpop.f32.mrb[0].mxu0
    %v311 = vpop.f32.mrb[0].mxu0
    %v312 = vpop.f32.mrb[0].mxu0
    %313 = vdwg.mxu0
    %v314 = vmax.f32 %v309, 0.0
    %v315 = vpack.c.bf16 %v314, %v314
    %v316 = vld [vmem:[#allocation7] sm:$0xf]
    %v317 = vld [vmem:[#allocation7 + $0x4] sm:$0xf]
    %v318 = vld [vmem:[#allocation7 + $0x8] sm:$0xf]
    %v319 = vld [vmem:[#allocation7 + $0xc] sm:$0xf]
    %v320 = vld [vmem:[#allocation7 + $0x10] sm:$0xf]
    %v321 = vld [vmem:[#allocation7 + $0x14] sm:$0xf]
    %v322 = vld [vmem:[#allocation7 + $0x18] sm:$0xf]
    %v323 = vld [vmem:[#allocation7 + $0x1c] sm:$0xf]
    %v324 = vld [vmem:[#allocation7 + $0x20] sm:$0xf]
    %v325 = vld [vmem:[#allocation7 + $0x24] sm:$0xf]
    %v326 = vld [vmem:[#allocation7 + $0x28] sm:$0xf]
    %v327 = vld [vmem:[#allocation7 + $0x2c] sm:$0xf]
    %v328 = vld [vmem:[#allocation7 + $0x30] sm:$0xf]
    %v329 = vld [vmem:[#allocation7 + $0x34] sm:$0xf]
    %v330 = vld [vmem:[#allocation7 + $0x38] sm:$0xf]
    %v331 = vld [vmem:[#allocation7 + $0x3c] sm:$0xf]
    %v332 = vld [vmem:[%s6] sm:$0x1]
    %v334 = vlaneseq
    %v335 = vshrl.u32 %v334, 7
    %v336 = vsub.s32 0, %v335
    %v337 = vrot.slane %v332, %v336
    %v355 = vunpack.c.l.b16 %v316
    %v356 = vunpack.c.l.b16 %v317
    %v357 = vunpack.c.l.b16 %v318
    %v358 = vunpack.c.l.b16 %v319
    %v359 = vunpack.c.l.b16 %v320
    %v360 = vunpack.c.l.b16 %v321
    %v361 = vunpack.c.l.b16 %v322
    %v362 = vunpack.c.l.b16 %v323
    %v363 = vunpack.c.l.b16 %v324
    %v364 = vunpack.c.l.b16 %v325
    %v365 = vunpack.c.l.b16 %v326
    %v366 = vunpack.c.l.b16 %v327
    %v367 = vunpack.c.l.b16 %v328
    %v368 = vunpack.c.l.b16 %v329
    %v369 = vunpack.c.l.b16 %v330
    %v370 = vunpack.c.l.b16 %v331
    %v371 = vpack.c.b16 %v356, %v355
    %v372 = vpack.c.b16 %v358, %v357
    %v373 = vpack.c.b16 %v360, %v359
    %v374 = vpack.c.b16 %v362, %v361
    %v375 = vpack.c.b16 %v364, %v363
    %v376 = vpack.c.b16 %v366, %v365
    %v377 = vpack.c.b16 %v368, %v367
    %v378 = vpack.c.b16 %v370, %v369
    %387 = vmatprep.subr.bf16.mxu0 0
    %388 = vmatpush1.bf16.msra.mxu0 %v371
    %389 = vmatprep.subr.bf16.mxu0 0
    %390 = vmatpush1.bf16.msra.mxu0 %v372
    %391 = vmatprep.subr.bf16.mxu0 0
    %392 = vmatpush1.bf16.msra.mxu0 %v373
    %393 = vmatprep.subr.bf16.mxu0 0
    %394 = vmatpush1.bf16.msra.mxu0 %v374
    %395 = vmatprep.subr.bf16.mxu0 0
    %396 = vmatpush1.bf16.msra.mxu0 %v375
    %397 = vmatprep.subr.bf16.mxu0 0
    %398 = vmatpush1.bf16.msra.mxu0 %v376
    %399 = vmatprep.subr.bf16.mxu0 0
    %400 = vmatpush1.bf16.msra.mxu0 %v377
    %401 = vmatprep.subr.bf16.mxu0 0
    %402 = vmatpush1.bf16.msra.mxu0 %v378
    %403 = vmatprep.subr.bf16.mxu0 0
    %404 = vmatpush1.bf16.msra.mxu0 0
    %405 = vmatprep.subr.bf16.mxu0 0
    %406 = vmatpush1.bf16.msra.mxu0 0
    %407 = vmatprep.subr.bf16.mxu0 0
    %408 = vmatpush1.bf16.msra.mxu0 0
    %409 = vmatprep.subr.bf16.mxu0 0
    %410 = vmatpush1.bf16.msra.mxu0 0
    %411 = vmatprep.subr.bf16.mxu0 0
    %412 = vmatpush1.bf16.msra.mxu0 0
    %413 = vmatprep.subr.bf16.mxu0 0
    %414 = vmatpush1.bf16.msra.mxu0 0
    %415 = vmatprep.subr.bf16.mxu0 0
    %416 = vmatpush1.bf16.msra.mxu0 0
    %417 = vmatprep.subr.bf16.mxu0 0
    %418 = vmatpush1.bf16.msra.mxu0 0
    %419 = vmatprep.mubr.bf16.mxu0 0
    %420 = vmatmul.mubr.bf16.gmra.mrb[0].mxu0 %v315
    %v421 = vpop.f32.mrb[0].mxu0
    %v422 = vadd.f32 %v337, %v421
    %v423 = vpop.f32.mrb[0].mxu0
    %v424 = vpop.f32.mrb[0].mxu0
    %v425 = vpop.f32.mrb[0].mxu0
    %426 = vdwg.mxu0
    %v427 = vmax.f32 %v422, 0.0
    %v428 = vpack.c.bf16 %v427, %v427
    %v429 = vld [vmem:[#allocation8] sm:$0xf]
    %v430 = vld [vmem:[#allocation8 + $0x4] sm:$0xf]
    %v431 = vld [vmem:[#allocation8 + $0x8] sm:$0xf]
    %v432 = vld [vmem:[#allocation8 + $0xc] sm:$0xf]
    %v433 = vld [vmem:[#allocation8 + $0x10] sm:$0xf]
    %v434 = vld [vmem:[#allocation8 + $0x14] sm:$0xf]
    %v435 = vld [vmem:[#allocation8 + $0x18] sm:$0xf]
    %v436 = vld [vmem:[#allocation8 + $0x1c] sm:$0xf]
    %v437 = vld [vmem:[#allocation8 + $0x20] sm:$0xf]
    %v438 = vld [vmem:[#allocation8 + $0x24] sm:$0xf]
    %v439 = vld [vmem:[#allocation8 + $0x28] sm:$0xf]
    %v440 = vld [vmem:[#allocation8 + $0x2c] sm:$0xf]
    %v441 = vld [vmem:[#allocation8 + $0x30] sm:$0xf]
    %v442 = vld [vmem:[#allocation8 + $0x34] sm:$0xf]
    %v443 = vld [vmem:[#allocation8 + $0x38] sm:$0xf]
    %v444 = vld [vmem:[#allocation8 + $0x3c] sm:$0xf]
    %v445 = vld [vmem:[%s8] sm:$0x1]
    %v447 = vlaneseq
    %v448 = vshrl.u32 %v447, 7
    %v449 = vsub.s32 0, %v448
    %v450 = vrot.slane %v445, %v449
    %v468 = vunpack.c.l.b16 %v429
    %v469 = vunpack.c.l.b16 %v430
    %v470 = vunpack.c.l.b16 %v431
    %v471 = vunpack.c.l.b16 %v432
    %v472 = vunpack.c.l.b16 %v433
    %v473 = vunpack.c.l.b16 %v434
    %v474 = vunpack.c.l.b16 %v435
    %v475 = vunpack.c.l.b16 %v436
    %v476 = vunpack.c.l.b16 %v437
    %v477 = vunpack.c.l.b16 %v438
    %v478 = vunpack.c.l.b16 %v439
    %v479 = vunpack.c.l.b16 %v440
    %v480 = vunpack.c.l.b16 %v441
    %v481 = vunpack.c.l.b16 %v442
    %v482 = vunpack.c.l.b16 %v443
    %v483 = vunpack.c.l.b16 %v444
    %v484 = vpack.c.b16 %v469, %v468
    %v485 = vpack.c.b16 %v471, %v470
    %v486 = vpack.c.b16 %v473, %v472
    %v487 = vpack.c.b16 %v475, %v474
    %v488 = vpack.c.b16 %v477, %v476
    %v489 = vpack.c.b16 %v479, %v478
    %v490 = vpack.c.b16 %v481, %v480
    %v491 = vpack.c.b16 %v483, %v482
    %500 = vmatprep.subr.bf16.mxu0 0
    %501 = vmatpush1.bf16.msra.mxu0 %v484
    %502 = vmatprep.subr.bf16.mxu0 0
    %503 = vmatpush1.bf16.msra.mxu0 %v485
    %504 = vmatprep.subr.bf16.mxu0 0
    %505 = vmatpush1.bf16.msra.mxu0 %v486
    %506 = vmatprep.subr.bf16.mxu0 0
    %507 = vmatpush1.bf16.msra.mxu0 %v487
    %508 = vmatprep.subr.bf16.mxu0 0
    %509 = vmatpush1.bf16.msra.mxu0 %v488
    %510 = vmatprep.subr.bf16.mxu0 0
    %511 = vmatpush1.bf16.msra.mxu0 %v489
    %512 = vmatprep.subr.bf16.mxu0 0
    %513 = vmatpush1.bf16.msra.mxu0 %v490
    %514 = vmatprep.subr.bf16.mxu0 0
    %515 = vmatpush1.bf16.msra.mxu0 %v491
    %516 = vmatprep.subr.bf16.mxu0 0
    %517 = vmatpush1.bf16.msra.mxu0 0
    %518 = vmatprep.subr.bf16.mxu0 0
    %519 = vmatpush1.bf16.msra.mxu0 0
    %520 = vmatprep.subr.bf16.mxu0 0
    %521 = vmatpush1.bf16.msra.mxu0 0
    %522 = vmatprep.subr.bf16.mxu0 0
    %523 = vmatpush1.bf16.msra.mxu0 0
    %524 = vmatprep.subr.bf16.mxu0 0
    %525 = vmatpush1.bf16.msra.mxu0 0
    %526 = vmatprep.subr.bf16.mxu0 0
    %527 = vmatpush1.bf16.msra.mxu0 0
    %528 = vmatprep.subr.bf16.mxu0 0
    %529 = vmatpush1.bf16.msra.mxu0 0
    %530 = vmatprep.subr.bf16.mxu0 0
    %531 = vmatpush1.bf16.msra.mxu0 0
    %532 = vmatprep.mubr.bf16.mxu0 0
    %533 = vmatmul.mubr.bf16.gmra.mrb[0].mxu0 %v428
    %v534 = vpop.f32.mrb[0].mxu0
    %v535 = vadd.f32 %v450, %v534
    %v536 = vpop.f32.mrb[0].mxu0
    %v537 = vpop.f32.mrb[0].mxu0
    %v538 = vpop.f32.mrb[0].mxu0
    %539 = vdwg.mxu0
    %540 = vst [vmem:[#allocation10] sm:$0xff] %v535
    // Predicated region
    $region54: #{neural_net_forward.1} parent=1 // pred_check
      _
    $region55: #{neural_net_forward.1} parent=1 // pred_check_branch
      %542 = sbr.rel (0) target = $region57
    $region56: #{neural_net_forward.1} parent=1 // pred_region
      %s544 = ssub.s32 128, 128
      %545 = vsyncadd [#allocation4], %s544
      %s547 = sshll.u32 [#allocation10], 4
      %s548 = int_to_ptr.vmem [resolvable:$true] %s547
      %550 = dma.vmem_to_hbm [thread:$0]  %s548, 128, %s9, [#allocation4]
    $region57: #{neural_net_forward.1} parent=1 // pred_fallthru
      _
    // Predicated region
    $region58: #{neural_net_forward.1} parent=1 // pred_check
      _
    $region59: #{neural_net_forward.1} parent=1 // pred_check_branch
      %552 = sbr.rel (0) target = $region61
    $region60: #{neural_net_forward.1} parent=1 // pred_region
      %553 = dma.done [#allocation4], 128
    $region61: #{neural_net_forward.1} parent=1 // pred_fallthru
      _
    %554 = vsyncpa [#allocation3], 1
    %555 = vsyncpa [#allocation6], 1
    %556 = vsyncpa [#allocation9], 1
    %557 = vsyncpa [#allocation4], 1

</llo_original>
